<compile_context>
chip_gen: v6e
topology: v6e:2x2x1
jax: 0.10.0
libtpu: 0.0.40
codegen_flags: <defaults>
</compile_context>

<pallas_src>
import functools

import jax
import jax.numpy as jnp
from jax.experimental import pallas as pl
from jax.experimental.pallas import tpu as pltpu

EPS = 1e-5
LANE = 128  # pad every feature dimension to one full vreg lane width


def _mynet3_kernel(x_ref, w_ref, v_ref, o_ref, *, in_dim):
    """Fused [Linear -> BN(train) -> ReLU] x3 -> Linear, fully VMEM-resident.

    x_ref: (B, in_dim)   f32   raw (unpadded) input
    w_ref: (4, 128, 128) bf16  zero-padded weights, layout (in, out), layer-major
    v_ref: (8, 128)      f32   rows 0-2 gamma1..3, rows 3-5 beta1..3, row 6 b4,
                               row 7 zeros (sublane pad)
    o_ref: (B, 128)      f32   lane-dense padded output (sliced in wrapper)

    Invariants relied upon (enforced by pack_params / the wrapper):
      * padded gamma/beta lanes are exactly 0 -> scale and shift are 0 there,
        so padded activation lanes stay exactly 0 into the next matmul;
      * no zero-padded batch rows are fed in -> BN stats cover real rows only;
      * hidden Linear biases are dropped: training-mode BN subtracts the
        per-feature mean, cancelling them exactly (only b4 is applied).
    """
    vecs = v_ref[...]                               # one (8,128) vreg load
    x = x_ref[...].astype(jnp.bfloat16)             # bf16 MXU operands

    # Layer 1: contract over only the real in_dim rows of the padded weight so
    # the wrapper never materializes a lane-padded copy of x in HBM.
    z = jnp.dot(x, w_ref[0, :in_dim, :], preferred_element_type=jnp.float32)

    h = None
    for layer in range(3):
        if layer > 0:
            z = jnp.dot(h, w_ref[layer], preferred_element_type=jnp.float32)
        # BatchNorm (training-mode batch stats), centered variance, folded into
        # one scale + shift:  y = s * (z - mean) + beta,  s = gamma*rsqrt(var+eps)
        mean = jnp.mean(z, axis=0, keepdims=True)
        zc = z - mean
        var = jnp.mean(zc * zc, axis=0, keepdims=True)
        s = vecs[layer:layer + 1] * jax.lax.rsqrt(var + EPS)
        h = jnp.maximum(s * zc + vecs[layer + 3:layer + 4], 0.0)  # ReLU (f32 VPU)
        h = h.astype(jnp.bfloat16)

    # Output layer: plain Linear, keeps its bias b4.
    o_ref[...] = (jnp.dot(h, w_ref[3], preferred_element_type=jnp.float32)
                  + vecs[6:7]).astype(o_ref.dtype)


def _pad2(a, rows, cols):
    return jnp.pad(a, ((0, rows - a.shape[0]), (0, cols - a.shape[1])))


def _padv(v):
    v = v.reshape(1, -1)
    return jnp.pad(v, ((0, 0), (0, LANE - v.shape[1])))


def pack_params(params):
    """One-time packing of the 14 Mynet3 tensors into 2 dense kernel inputs.

    Call ONCE at init and keep (w_packed, vec_packed) as the stored parameter
    format -- do NOT call per forward pass.

    params = (w1,b1,g1,be1, w2,b2,g2,be2, w3,b3,g3,be3, w4,b4) with weights as
    (in_features, out_features) (transposed PyTorch layout).  Hidden biases
    b1/b2/b3 are intentionally not packed (cancelled by training-mode BN).
    Padded gamma/beta lanes are zero by construction -- the kernel relies on
    that to keep padded activation lanes exactly zero.
    """
    (w1, _b1, g1, be1, w2, _b2, g2, be2, w3, _b3, g3, be3, w4, b4) = params
    for w in (w1, w2, w3, w4):
        assert w.shape[0] <= LANE and w.shape[1] <= LANE
    w_packed = jnp.stack(
        [_pad2(w, LANE, LANE) for w in (w1, w2, w3, w4)]).astype(jnp.bfloat16)
    vec_packed = jnp.concatenate(
        [_padv(g1), _padv(g2), _padv(g3),          # rows 0-2: gammas (pad = 0)
         _padv(be1), _padv(be2), _padv(be3),       # rows 3-5: betas  (pad = 0)
         _padv(b4),                                # row  6  : output bias
         jnp.zeros((1, LANE), jnp.float32)],       # row  7  : sublane pad
        axis=0)
    return jax.device_put(w_packed), jax.device_put(vec_packed)


@functools.partial(jax.jit, static_argnames=("out_dim",))
def mynet3_forward(x, w_packed, vec_packed, *, out_dim):
    """x: (B, input_dim) f32, unpadded; packed params from pack_params()."""
    B, in_dim = x.shape
    assert in_dim <= LANE and out_dim <= LANE
    vmem = pl.BlockSpec(memory_space=pltpu.MemorySpace.VMEM)
    out = pl.pallas_call(
        functools.partial(_mynet3_kernel, in_dim=in_dim),
        out_shape=jax.ShapeDtypeStruct((B, LANE), jnp.float32),
        in_specs=[vmem, vmem, vmem],
        out_specs=vmem,
    )(x, w_packed, vec_packed)
    return out[:, :out_dim]


def init_params(key, input_dim, h1, h2, h3, out_dim):
    dims = [(input_dim, h1), (h1, h2), (h2, h3), (h3, out_dim)]
    params = []
    for li, (din, dout) in enumerate(dims):
        key, kw, kb, kg, kbe = jax.random.split(key, 5)
        bound = 1.0 / jnp.sqrt(din)
        w = jax.random.uniform(kw, (din, dout), jnp.float32, -bound, bound)
        b = jax.random.uniform(kb, (1, dout), jnp.float32, -bound, bound)
        params += [w, b]
        if li < 3:  # BN affine params for the three hidden layers
            gamma = 1.0 + 0.1 * jax.random.normal(kg, (1, dout), jnp.float32)
            beta = 0.1 * jax.random.normal(kbe, (1, dout), jnp.float32)
            params += [gamma, beta]
    return tuple(params)


def reference_forward(x, params):
    """PyTorch-faithful forward (hidden biases included, standard training-mode
    BatchNorm).  Matmuls use bf16 operands with f32 accumulation so the
    comparison matches the kernel's MXU precision."""
    (w1, b1, g1, be1, w2, b2, g2, be2, w3, b3, g3, be3, w4, b4) = params

    def dot_bf16(a, w):
        return jnp.dot(a.astype(jnp.bfloat16), w.astype(jnp.bfloat16),
                       preferred_element_type=jnp.float32)

    def bn_relu(h, g, be):
        m = jnp.mean(h, axis=0, keepdims=True)
        v = jnp.mean((h - m) ** 2, axis=0, keepdims=True)
        return jnp.maximum(g * (h - m) / jnp.sqrt(v + EPS) + be, 0.0)

    h = bn_relu(dot_bf16(x, w1) + b1, g1, be1)
    h = bn_relu(dot_bf16(h, w2) + b2, g2, be2)
    h = bn_relu(dot_bf16(h, w3) + b3, g3, be3)
    return dot_bf16(h, w4) + b4


if __name__ == "__main__":
    key = jax.random.PRNGKey(0)
    B, input_dim, h1, h2, h3, out_dim = 8, 32, 64, 64, 32, 16

    kx, kp = jax.random.split(key)
    x = jax.random.normal(kx, (B, input_dim), jnp.float32)
    params = init_params(kp, input_dim, h1, h2, h3, out_dim)

    # One-time packing (hoisted out of the per-call path).
    w_packed, vec_packed = pack_params(params)

    y = mynet3_forward(x, w_packed, vec_packed, out_dim=out_dim)
    y = jax.block_until_ready(y)

    y_ref = reference_forward(x, params)
    assert y.shape == (B, out_dim)
    # Tolerance covers bf16 matmul operands + BN rsqrt amplification across
    # three layers; implementation bugs produce O(1) errors, far outside this.
    assert jnp.allclose(y, y_ref, atol=1e-1, rtol=1e-1), float(
        jnp.max(jnp.abs(y - y_ref)))

    print("KERNEL_OK")
</pallas_src>

<mosaic_0001>
module attributes {stable_mosaic.version = 11 : i64} {
  func.func @_mynet3_kernel(%arg0: memref<8x32xf32, #tpu.memory_space<vmem>>, %arg1: memref<4x128x128xbf16, #tpu.memory_space<vmem>>, %arg2: memref<8x128xf32, #tpu.memory_space<vmem>>, %arg3: memref<8x128xf32, #tpu.memory_space<vmem>>) attributes {dimension_semantics = [], scalar_prefetch = 0 : i64, scratch_operands = 0 : i64, tpu.core_type = #tpu.core_type<tc>} {
    %c0 = arith.constant 0 : index
    %c0_0 = arith.constant 0 : index
    %0 = vector.load %arg2[%c0, %c0_0] : memref<8x128xf32, #tpu.memory_space<vmem>>, vector<8x128xf32>
    %c0_1 = arith.constant 0 : index
    %c0_2 = arith.constant 0 : index
    %1 = vector.load %arg0[%c0_1, %c0_2] : memref<8x32xf32, #tpu.memory_space<vmem>>, vector<8x32xf32>
    %2 = arith.truncf %1 : vector<8x32xf32> to vector<8x32xbf16>
    %c0_3 = arith.constant 0 : index
    %c0_4 = arith.constant 0 : index
    %c0_5 = arith.constant 0 : index
    %3 = vector.load %arg1[%c0_3, %c0_4, %c0_5] : memref<4x128x128xbf16, #tpu.memory_space<vmem>>, vector<1x32x128xbf16>
    %4 = vector.shape_cast %3 : vector<1x32x128xbf16> to vector<32x128xbf16>
    %cst = arith.constant dense<0.000000e+00> : vector<8x128xf32>
    %5 = tpu.matmul %2, %4, %cst {dimension_numbers = #tpu.dot_dimension_numbers<[1], [0], [0], [1], [0, 0, 1, 1], [], []>} : vector<8x32xbf16>, vector<32x128xbf16>, vector<8x128xf32> -> vector<8x128xf32>
    %cst_6 = arith.constant dense<0.000000e+00> : vector<128xf32>
    %6 = vector.multi_reduction <add>, %5, %cst_6 [0] : vector<8x128xf32> to vector<128xf32>
    %7 = vector.shape_cast %6 : vector<128xf32> to vector<1x128xf32>
    %cst_7 = arith.constant 8.000000e+00 : f32
    %8 = vector.broadcast %cst_7 : f32 to vector<1x128xf32>
    %9 = arith.divf %7, %8 : vector<1x128xf32>
    %10 = vector.broadcast %9 : vector<1x128xf32> to vector<8x128xf32>
    %11 = arith.subf %5, %10 : vector<8x128xf32>
    %12 = arith.mulf %11, %11 : vector<8x128xf32>
    %cst_8 = arith.constant dense<0.000000e+00> : vector<128xf32>
    %13 = vector.multi_reduction <add>, %12, %cst_8 [0] : vector<8x128xf32> to vector<128xf32>
    %14 = vector.shape_cast %13 : vector<128xf32> to vector<1x128xf32>
    %cst_9 = arith.constant 8.000000e+00 : f32
    %15 = vector.broadcast %cst_9 : f32 to vector<1x128xf32>
    %16 = arith.divf %14, %15 : vector<1x128xf32>
    %17 = vector.extract_strided_slice %0 {offsets = [0, 0], sizes = [1, 128], strides = [1, 1]} : vector<8x128xf32> to vector<1x128xf32>
    %cst_10 = arith.constant 9.99999974E-6 : f32
    %18 = vector.broadcast %cst_10 : f32 to vector<1x128xf32>
    %19 = arith.addf %16, %18 : vector<1x128xf32>
    %20 = math.rsqrt %19 : vector<1x128xf32>
    %21 = arith.mulf %17, %20 : vector<1x128xf32>
    %22 = vector.broadcast %21 : vector<1x128xf32> to vector<8x128xf32>
    %23 = arith.mulf %22, %11 : vector<8x128xf32>
    %24 = vector.extract_strided_slice %0 {offsets = [3, 0], sizes = [1, 128], strides = [1, 1]} : vector<8x128xf32> to vector<1x128xf32>
    %25 = vector.broadcast %24 : vector<1x128xf32> to vector<8x128xf32>
    %26 = arith.addf %23, %25 : vector<8x128xf32>
    %cst_11 = arith.constant 0.000000e+00 : f32
    %27 = vector.broadcast %cst_11 : f32 to vector<8x128xf32>
    %28 = arith.maximumf %26, %27 : vector<8x128xf32>
    %29 = arith.truncf %28 : vector<8x128xf32> to vector<8x128xbf16>
    %c1 = arith.constant 1 : index
    %c0_12 = arith.constant 0 : index
    %c0_13 = arith.constant 0 : index
    %30 = vector.load %arg1[%c1, %c0_12, %c0_13] : memref<4x128x128xbf16, #tpu.memory_space<vmem>>, vector<1x128x128xbf16>
    %31 = vector.shape_cast %30 : vector<1x128x128xbf16> to vector<128x128xbf16>
    %cst_14 = arith.constant dense<0.000000e+00> : vector<8x128xf32>
    %32 = tpu.matmul %29, %31, %cst_14 {dimension_numbers = #tpu.dot_dimension_numbers<[1], [0], [0], [1], [0, 0, 1, 1], [], []>} : vector<8x128xbf16>, vector<128x128xbf16>, vector<8x128xf32> -> vector<8x128xf32>
    %cst_15 = arith.constant dense<0.000000e+00> : vector<128xf32>
    %33 = vector.multi_reduction <add>, %32, %cst_15 [0] : vector<8x128xf32> to vector<128xf32>
    %34 = vector.shape_cast %33 : vector<128xf32> to vector<1x128xf32>
    %cst_16 = arith.constant 8.000000e+00 : f32
    %35 = vector.broadcast %cst_16 : f32 to vector<1x128xf32>
    %36 = arith.divf %34, %35 : vector<1x128xf32>
    %37 = vector.broadcast %36 : vector<1x128xf32> to vector<8x128xf32>
    %38 = arith.subf %32, %37 : vector<8x128xf32>
    %39 = arith.mulf %38, %38 : vector<8x128xf32>
    %cst_17 = arith.constant dense<0.000000e+00> : vector<128xf32>
    %40 = vector.multi_reduction <add>, %39, %cst_17 [0] : vector<8x128xf32> to vector<128xf32>
    %41 = vector.shape_cast %40 : vector<128xf32> to vector<1x128xf32>
    %cst_18 = arith.constant 8.000000e+00 : f32
    %42 = vector.broadcast %cst_18 : f32 to vector<1x128xf32>
    %43 = arith.divf %41, %42 : vector<1x128xf32>
    %44 = vector.extract_strided_slice %0 {offsets = [1, 0], sizes = [1, 128], strides = [1, 1]} : vector<8x128xf32> to vector<1x128xf32>
    %cst_19 = arith.constant 9.99999974E-6 : f32
    %45 = vector.broadcast %cst_19 : f32 to vector<1x128xf32>
    %46 = arith.addf %43, %45 : vector<1x128xf32>
    %47 = math.rsqrt %46 : vector<1x128xf32>
    %48 = arith.mulf %44, %47 : vector<1x128xf32>
    %49 = vector.broadcast %48 : vector<1x128xf32> to vector<8x128xf32>
    %50 = arith.mulf %49, %38 : vector<8x128xf32>
    %51 = vector.extract_strided_slice %0 {offsets = [4, 0], sizes = [1, 128], strides = [1, 1]} : vector<8x128xf32> to vector<1x128xf32>
    %52 = vector.broadcast %51 : vector<1x128xf32> to vector<8x128xf32>
    %53 = arith.addf %50, %52 : vector<8x128xf32>
    %cst_20 = arith.constant 0.000000e+00 : f32
    %54 = vector.broadcast %cst_20 : f32 to vector<8x128xf32>
    %55 = arith.maximumf %53, %54 : vector<8x128xf32>
    %56 = arith.truncf %55 : vector<8x128xf32> to vector<8x128xbf16>
    %c2 = arith.constant 2 : index
    %c0_21 = arith.constant 0 : index
    %c0_22 = arith.constant 0 : index
    %57 = vector.load %arg1[%c2, %c0_21, %c0_22] : memref<4x128x128xbf16, #tpu.memory_space<vmem>>, vector<1x128x128xbf16>
    %58 = vector.shape_cast %57 : vector<1x128x128xbf16> to vector<128x128xbf16>
    %cst_23 = arith.constant dense<0.000000e+00> : vector<8x128xf32>
    %59 = tpu.matmul %56, %58, %cst_23 {dimension_numbers = #tpu.dot_dimension_numbers<[1], [0], [0], [1], [0, 0, 1, 1], [], []>} : vector<8x128xbf16>, vector<128x128xbf16>, vector<8x128xf32> -> vector<8x128xf32>
    %cst_24 = arith.constant dense<0.000000e+00> : vector<128xf32>
    %60 = vector.multi_reduction <add>, %59, %cst_24 [0] : vector<8x128xf32> to vector<128xf32>
    %61 = vector.shape_cast %60 : vector<128xf32> to vector<1x128xf32>
    %cst_25 = arith.constant 8.000000e+00 : f32
    %62 = vector.broadcast %cst_25 : f32 to vector<1x128xf32>
    %63 = arith.divf %61, %62 : vector<1x128xf32>
    %64 = vector.broadcast %63 : vector<1x128xf32> to vector<8x128xf32>
    %65 = arith.subf %59, %64 : vector<8x128xf32>
    %66 = arith.mulf %65, %65 : vector<8x128xf32>
    %cst_26 = arith.constant dense<0.000000e+00> : vector<128xf32>
    %67 = vector.multi_reduction <add>, %66, %cst_26 [0] : vector<8x128xf32> to vector<128xf32>
    %68 = vector.shape_cast %67 : vector<128xf32> to vector<1x128xf32>
    %cst_27 = arith.constant 8.000000e+00 : f32
    %69 = vector.broadcast %cst_27 : f32 to vector<1x128xf32>
    %70 = arith.divf %68, %69 : vector<1x128xf32>
    %71 = vector.extract_strided_slice %0 {offsets = [2, 0], sizes = [1, 128], strides = [1, 1]} : vector<8x128xf32> to vector<1x128xf32>
    %cst_28 = arith.constant 9.99999974E-6 : f32
    %72 = vector.broadcast %cst_28 : f32 to vector<1x128xf32>
    %73 = arith.addf %70, %72 : vector<1x128xf32>
    %74 = math.rsqrt %73 : vector<1x128xf32>
    %75 = arith.mulf %71, %74 : vector<1x128xf32>
    %76 = vector.broadcast %75 : vector<1x128xf32> to vector<8x128xf32>
    %77 = arith.mulf %76, %65 : vector<8x128xf32>
    %78 = vector.extract_strided_slice %0 {offsets = [5, 0], sizes = [1, 128], strides = [1, 1]} : vector<8x128xf32> to vector<1x128xf32>
    %79 = vector.broadcast %78 : vector<1x128xf32> to vector<8x128xf32>
    %80 = arith.addf %77, %79 : vector<8x128xf32>
    %cst_29 = arith.constant 0.000000e+00 : f32
    %81 = vector.broadcast %cst_29 : f32 to vector<8x128xf32>
    %82 = arith.maximumf %80, %81 : vector<8x128xf32>
    %83 = arith.truncf %82 : vector<8x128xf32> to vector<8x128xbf16>
    %c3 = arith.constant 3 : index
    %c0_30 = arith.constant 0 : index
    %c0_31 = arith.constant 0 : index
    %84 = vector.load %arg1[%c3, %c0_30, %c0_31] : memref<4x128x128xbf16, #tpu.memory_space<vmem>>, vector<1x128x128xbf16>
    %85 = vector.shape_cast %84 : vector<1x128x128xbf16> to vector<128x128xbf16>
    %cst_32 = arith.constant dense<0.000000e+00> : vector<8x128xf32>
    %86 = tpu.matmul %83, %85, %cst_32 {dimension_numbers = #tpu.dot_dimension_numbers<[1], [0], [0], [1], [0, 0, 1, 1], [], []>} : vector<8x128xbf16>, vector<128x128xbf16>, vector<8x128xf32> -> vector<8x128xf32>
    %87 = vector.extract_strided_slice %0 {offsets = [6, 0], sizes = [1, 128], strides = [1, 1]} : vector<8x128xf32> to vector<1x128xf32>
    %88 = vector.broadcast %87 : vector<1x128xf32> to vector<8x128xf32>
    %89 = arith.addf %86, %88 : vector<8x128xf32>
    %c0_33 = arith.constant 0 : index
    %c0_34 = arith.constant 0 : index
    %90 = vector.load %arg3[%c0_33, %c0_34] : memref<8x128xf32, #tpu.memory_space<vmem>>, vector<8x128xf32>
    tpu.vector_store %arg3[%c0_33, %c0_34], %89 {strides = array<i32>} : memref<8x128xf32, #tpu.memory_space<vmem>>, vector<8x128xf32>,
    return
  }
}

</mosaic_0001>

<llo_original>
// kernel: mynet3_forward.1
$region0: #{mynet3_forward.1}
  #allocation0 [shape = 'u32[]', space=smem, size = 0x4, offset = 0x4, fixed_abs, tag = 'smem constant byte address 0x4 - core index']
  #allocation1 [shape = 'u32[144,128]{1,0:T(1,128)}', space=vmem, size = 0x12000, scoped, tag = 'internal scratch']
  %s0 = inlined_call_operand.hbm [shape: f32[8,32], index: 0, kind: input, shape index: {}]
  %s1 = inlined_call_operand.hbm [shape: bf16[4,128,128], index: 1, kind: input, shape index: {}]
  %s2 = inlined_call_operand.hbm [shape: f32[8,128], index: 2, kind: input, shape index: {}]
  %s3 = inlined_call_operand.hbm [shape: f32[8,128], index: 3, kind: output, shape index: {}]
  %s4 = sld [smem:[#allocation0]]
  $region34: #{mynet3_forward.1} parent=0
    _
  %s6 = ssub.s32 1, %s4
  %s7 = scalar_select 0, %s6, %s4
  $region1: #{mynet3_forward.1} parent=0
    #allocation2 [shape = 'u8[4096]{0}', space=vmem, size = 0x1000, scoped, tag = 'input window, operand 0, single buffered']
    #allocation3 [shape = 's32[1]{0}', space=sflag, size = 0x4, scoped, tag = 'scoped memory for mynet3_forward.1']
    #allocation4 [shape = 's32[1]{0}', space=sflag, size = 0x4, scoped, tag = 'scoped memory for mynet3_forward.1']
    #allocation5 [shape = 'u8[131072]{0}', space=vmem, size = 0x20000, scoped, tag = 'input window, operand 1, single buffered']
    #allocation6 [shape = 's32[1]{0}', space=sflag, size = 0x4, scoped, tag = 'scoped memory for mynet3_forward.1']
    #allocation7 [shape = 'u8[4096]{0}', space=vmem, size = 0x1000, scoped, tag = 'input window, operand 2, single buffered']
    #allocation8 [shape = 'u8[4096]{0}', space=vmem, size = 0x1000, scoped, tag = 'output window, operand 0, single buffered']
    %8 = vsyncpa [#allocation3], 0
    %9 = vsyncpa [#allocation6], 0
    %10 = vsyncpa [#allocation4], 0
    // Predicated region
    $region2: #{mynet3_forward.1} parent=1 // pred_check
      _
    $region3: #{mynet3_forward.1} parent=1 // pred_check_branch
      %12 = sbr.rel (0) target = $region5
    $region4: #{mynet3_forward.1} parent=1 // pred_region
      %s14 = ssub.s32 128, 128
      %15 = vsyncadd [#allocation3], %s14
      %s17 = sshll.u32 [#allocation2], 4
      %s18 = int_to_ptr.vmem [resolvable:$true] %s17
      %20 = dma.hbm_to_vmem [thread:$0]  %s0, 128, %s18, [#allocation3]
    $region5: #{mynet3_forward.1} parent=1 // pred_fallthru
      _
    // Predicated region
    $region6: #{mynet3_forward.1} parent=1 // pred_check
      _
    $region7: #{mynet3_forward.1} parent=1 // pred_check_branch
      %22 = sbr.rel (0) target = $region9
    $region8: #{mynet3_forward.1} parent=1 // pred_region
      %s24 = ssub.s32 4096, 4096
      %25 = vsyncadd [#allocation6], %s24
      %s26 = sshll.u32 [#allocation5], 4
      %s27 = int_to_ptr.vmem [resolvable:$true] %s26
      %32 = dma.hbm_to_vmem [thread:$0]  %s1, 4096, %s27, [#allocation6], 64, 64, 4
    $region9: #{mynet3_forward.1} parent=1 // pred_fallthru
      _
    // Predicated region
    $region10: #{mynet3_forward.1} parent=1 // pred_check
      _
    $region11: #{mynet3_forward.1} parent=1 // pred_check_branch
      %34 = sbr.rel (0) target = $region13
    $region12: #{mynet3_forward.1} parent=1 // pred_region
      %s36 = ssub.s32 128, 128
      %37 = vsyncadd [#allocation6], %s36
      %s39 = sshll.u32 [#allocation7], 4
      %s40 = int_to_ptr.vmem [resolvable:$true] %s39
      %42 = dma.hbm_to_vmem [thread:$0]  %s2, 128, %s40, [#allocation6]
    $region13: #{mynet3_forward.1} parent=1 // pred_fallthru
      _
    // Predicated region
    $region14: #{mynet3_forward.1} parent=1 // pred_check
      _
    $region15: #{mynet3_forward.1} parent=1 // pred_check_branch
      %44 = sbr.rel (0) target = $region17
    $region16: #{mynet3_forward.1} parent=1 // pred_region
      %45 = dma.done [#allocation3], 128
    $region17: #{mynet3_forward.1} parent=1 // pred_fallthru
      _
    // Predicated region
    $region18: #{mynet3_forward.1} parent=1 // pred_check
      _
    $region19: #{mynet3_forward.1} parent=1 // pred_check_branch
      %47 = sbr.rel (0) target = $region21
    $region20: #{mynet3_forward.1} parent=1 // pred_region
      %48 = dma.done [#allocation6], 4096
    $region21: #{mynet3_forward.1} parent=1 // pred_fallthru
      _
    // Predicated region
    $region22: #{mynet3_forward.1} parent=1 // pred_check
      _
    $region23: #{mynet3_forward.1} parent=1 // pred_check_branch
      %50 = sbr.rel (0) target = $region25
    $region24: #{mynet3_forward.1} parent=1 // pred_region
      %51 = dma.done [#allocation6], 128
    $region25: #{mynet3_forward.1} parent=1 // pred_fallthru
      _
    %v53 = vld [vmem:[#allocation7] sm:$0xff]
    %v54 = vld [vmem:[#allocation2] sm:$0xff]
    %v55 = vpack.c.bf16 %v54, %v54
    %v56 = vld [vmem:[#allocation5] sm:$0xf]
    %v57 = vld [vmem:[#allocation5 + $0x4] sm:$0xf]
    %v58 = vld [vmem:[#allocation5 + $0x8] sm:$0xf]
    %v59 = vld [vmem:[#allocation5 + $0xc] sm:$0xf]
    %v64 = vunpack.c.l.b16 %v56
    %v65 = vunpack.c.l.b16 %v57
    %v66 = vunpack.c.l.b16 %v58
    %v67 = vunpack.c.l.b16 %v59
    %v68 = vpack.c.b16 %v65, %v64
    %v69 = vpack.c.b16 %v67, %v66
    %vm72 = vcmask 261120
    %v74 = vsel %vm72, %v55, 0
    %76 = vmatprep.subr.bf16.mxu0 0
    %77 = vmatpush1.bf16.msra.mxu0 0
    %78 = vmatprep.subr.bf16.mxu0 0
    %79 = vmatpush1.bf16.msra.mxu0 0
    %80 = vmatprep.subr.bf16.mxu0 0
    %81 = vmatpush1.bf16.msra.mxu0 0
    %82 = vmatprep.subr.bf16.mxu0 0
    %83 = vmatpush1.bf16.msra.mxu0 0
    %84 = vmatprep.subr.bf16.mxu0 0
    %85 = vmatpush1.bf16.msra.mxu0 0
    %86 = vmatprep.subr.bf16.mxu0 0
    %87 = vmatpush1.bf16.msra.mxu0 0
    %88 = vmatprep.subr.bf16.mxu0 0
    %89 = vmatpush1.bf16.msra.mxu0 %v69
    %90 = vmatprep.subr.bf16.mxu0 0
    %91 = vmatpush1.bf16.msra.mxu0 %v68
    %92 = vmatprep.subr.bf16.mxu0 0
    %93 = vmatpush2.bf16.msra.mxu0 0
    %94 = vmatprep.subr.bf16.mxu0 0
    %95 = vmatpush2.bf16.msra.mxu0 0
    %96 = vmatprep.subr.bf16.mxu0 0
    %97 = vmatpush2.bf16.msra.mxu0 0
    %98 = vmatprep.subr.bf16.mxu0 0
    %99 = vmatpush2.bf16.msra.mxu0 0
    %100 = vmatprep.subr.bf16.mxu0 0
    %101 = vmatpush2.bf16.msra.mxu0 0
    %102 = vmatprep.subr.bf16.mxu0 0
    %103 = vmatpush2.bf16.msra.mxu0 0
    %104 = vmatprep.subr.bf16.mxu0 0
    %105 = vmatpush2.bf16.msra.mxu0 0
    %106 = vmatprep.subr.bf16.mxu0 0
    %107 = vmatpush2.bf16.msra.mxu0 0
    %108 = vmatprep.mubr.bf16.mxu0 0
    %109 = vmatmul.mubr.bf16.gmra.mxu0 %v74
    %v110 = vpop.f32.mrf.mxu0
    %v111 = vadd.f32 0.0, %v110
    %v112 = vpop.f32.mrf.mxu0
    %v113 = vpop.f32.mrf.mxu0
    %v114 = vpop.f32.mrf.mxu0
    %115 = vdwg.mxu0
    %v116 = vrot.slane %v111, 4
    %v117 = vadd.f32 %v111, %v116
    %v118 = vrot.slane %v117, 2
    %v119 = vadd.f32 %v117, %v118
    %v120 = vrot.slane %v119, 1
    %v121 = vadd.f32 %v119, %v120
    %v122 = vrcp.pop 8.0
    %v123 = vmul.f32 %v121, %v122
    %v124 = vsub.f32 %v111, %v123
    %v125 = vmul.f32 %v124, %v124
    %v126 = vrot.slane %v125, 4
    %v127 = vadd.f32 %v125, %v126
    %v128 = vrot.slane %v127, 2
    %v129 = vadd.f32 %v127, %v128
    %v130 = vrot.slane %v129, 1
    %v131 = vadd.f32 %v129, %v130
    %v132 = vmul.f32 %v131, %v122
    %v133 = vadd.f32 %v132, 1e-05
    %v134 = vrsqrt.pop %v133
    %v135 = vmul.f32 %v53, %v134
    %v136 = vlaneseq
    %v137 = vshrl.u32 %v136, 7
    %v138 = vsub.s32 0, %v137
    %v139 = vrot.slane %v135, %v138
    %v140 = vmul.f32 %v139, %v124
    %v141 = vlaneseq
    %v142 = vshrl.u32 %v141, 7
    %v143 = vsub.s32 3, %v142
    %v144 = vrot.slane %v53, %v143
    %v145 = vadd.f32 %v140, %v144
    %v146 = vmax.f32 %v145, 0.0
    %v147 = vpack.c.bf16 %v146, %v146
    %s148 = scalar_lea.vmem [#allocation5], 64
    %v149 = vld [vmem:[%s148] sm:$0xf]
    %v150 = vld [vmem:[%s148 + $0x4] sm:$0xf]
    %v151 = vld [vmem:[%s148 + $0x8] sm:$0xf]
    %v152 = vld [vmem:[%s148 + $0xc] sm:$0xf]
    %v153 = vld [vmem:[%s148 + $0x10] sm:$0xf]
    %v154 = vld [vmem:[%s148 + $0x14] sm:$0xf]
    %v155 = vld [vmem:[%s148 + $0x18] sm:$0xf]
    %v156 = vld [vmem:[%s148 + $0x1c] sm:$0xf]
    %v157 = vld [vmem:[%s148 + $0x20] sm:$0xf]
    %v158 = vld [vmem:[%s148 + $0x24] sm:$0xf]
    %v159 = vld [vmem:[%s148 + $0x28] sm:$0xf]
    %v160 = vld [vmem:[%s148 + $0x2c] sm:$0xf]
    %v161 = vld [vmem:[%s148 + $0x30] sm:$0xf]
    %v162 = vld [vmem:[%s148 + $0x34] sm:$0xf]
    %v163 = vld [vmem:[%s148 + $0x38] sm:$0xf]
    %v164 = vld [vmem:[%s148 + $0x3c] sm:$0xf]
    %v181 = vunpack.c.l.b16 %v149
    %v182 = vunpack.c.l.b16 %v150
    %v183 = vunpack.c.l.b16 %v151
    %v184 = vunpack.c.l.b16 %v152
    %v185 = vunpack.c.l.b16 %v153
    %v186 = vunpack.c.l.b16 %v154
    %v187 = vunpack.c.l.b16 %v155
    %v188 = vunpack.c.l.b16 %v156
    %v189 = vunpack.c.l.b16 %v157
    %v190 = vunpack.c.l.b16 %v158
    %v191 = vunpack.c.l.b16 %v159
    %v192 = vunpack.c.l.b16 %v160
    %v193 = vunpack.c.l.b16 %v161
    %v194 = vunpack.c.l.b16 %v162
    %v195 = vunpack.c.l.b16 %v163
    %v196 = vunpack.c.l.b16 %v164
    %v197 = vpack.c.b16 %v182, %v181
    %v198 = vpack.c.b16 %v184, %v183
    %v199 = vpack.c.b16 %v186, %v185
    %v200 = vpack.c.b16 %v188, %v187
    %v201 = vpack.c.b16 %v190, %v189
    %v202 = vpack.c.b16 %v192, %v191
    %v203 = vpack.c.b16 %v194, %v193
    %v204 = vpack.c.b16 %v196, %v195
    %213 = vmatprep.subr.bf16.mxu0 0
    %214 = vmatpush1.bf16.msra.mxu0 %v204
    %215 = vmatprep.subr.bf16.mxu0 0
    %216 = vmatpush1.bf16.msra.mxu0 %v203
    %217 = vmatprep.subr.bf16.mxu0 0
    %218 = vmatpush1.bf16.msra.mxu0 %v202
    %219 = vmatprep.subr.bf16.mxu0 0
    %220 = vmatpush1.bf16.msra.mxu0 %v201
    %221 = vmatprep.subr.bf16.mxu0 0
    %222 = vmatpush1.bf16.msra.mxu0 %v200
    %223 = vmatprep.subr.bf16.mxu0 0
    %224 = vmatpush1.bf16.msra.mxu0 %v199
    %225 = vmatprep.subr.bf16.mxu0 0
    %226 = vmatpush1.bf16.msra.mxu0 %v198
    %227 = vmatprep.subr.bf16.mxu0 0
    %228 = vmatpush1.bf16.msra.mxu0 %v197
    %229 = vmatprep.subr.bf16.mxu0 0
    %230 = vmatpush2.bf16.msra.mxu0 0
    %231 = vmatprep.subr.bf16.mxu0 0
    %232 = vmatpush2.bf16.msra.mxu0 0
    %233 = vmatprep.subr.bf16.mxu0 0
    %234 = vmatpush2.bf16.msra.mxu0 0
    %235 = vmatprep.subr.bf16.mxu0 0
    %236 = vmatpush2.bf16.msra.mxu0 0
    %237 = vmatprep.subr.bf16.mxu0 0
    %238 = vmatpush2.bf16.msra.mxu0 0
    %239 = vmatprep.subr.bf16.mxu0 0
    %240 = vmatpush2.bf16.msra.mxu0 0
    %241 = vmatprep.subr.bf16.mxu0 0
    %242 = vmatpush2.bf16.msra.mxu0 0
    %243 = vmatprep.subr.bf16.mxu0 0
    %244 = vmatpush2.bf16.msra.mxu0 0
    %245 = vmatprep.mubr.bf16.mxu0 0
    %246 = vmatmul.mubr.bf16.gmra.mxu0 %v147
    %v247 = vpop.f32.mrf.mxu0
    %v248 = vadd.f32 0.0, %v247
    %v249 = vpop.f32.mrf.mxu0
    %v250 = vpop.f32.mrf.mxu0
    %v251 = vpop.f32.mrf.mxu0
    %252 = vdwg.mxu0
    %v253 = vrot.slane %v248, 4
    %v254 = vadd.f32 %v248, %v253
    %v255 = vrot.slane %v254, 2
    %v256 = vadd.f32 %v254, %v255
    %v257 = vrot.slane %v256, 1
    %v258 = vadd.f32 %v256, %v257
    %v259 = vmul.f32 %v258, %v122
    %v260 = vsub.f32 %v248, %v259
    %v261 = vmul.f32 %v260, %v260
    %v262 = vrot.slane %v261, 4
    %v263 = vadd.f32 %v261, %v262
    %v264 = vrot.slane %v263, 2
    %v265 = vadd.f32 %v263, %v264
    %v266 = vrot.slane %v265, 1
    %v267 = vadd.f32 %v265, %v266
    %v268 = vmul.f32 %v267, %v122
    %v269 = vadd.f32 %v268, 1e-05
    %v270 = vrsqrt.pop %v269
    %v271 = vmul.f32 %v53, %v270
    %v272 = vlaneseq
    %v273 = vshrl.u32 %v272, 7
    %v274 = vsub.s32 1, %v273
    %v275 = vrot.slane %v271, %v274
    %v276 = vmul.f32 %v275, %v260
    %v277 = vlaneseq
    %v278 = vshrl.u32 %v277, 7
    %v279 = vsub.s32 4, %v278
    %v280 = vrot.slane %v53, %v279
    %v281 = vadd.f32 %v276, %v280
    %v282 = vmax.f32 %v281, 0.0
    %v283 = vpack.c.bf16 %v282, %v282
    %s284 = scalar_lea.vmem [#allocation5], 128
    %v285 = vld [vmem:[%s284] sm:$0xf]
    %v286 = vld [vmem:[%s284 + $0x4] sm:$0xf]
    %v287 = vld [vmem:[%s284 + $0x8] sm:$0xf]
    %v288 = vld [vmem:[%s284 + $0xc] sm:$0xf]
    %v289 = vld [vmem:[%s284 + $0x10] sm:$0xf]
    %v290 = vld [vmem:[%s284 + $0x14] sm:$0xf]
    %v291 = vld [vmem:[%s284 + $0x18] sm:$0xf]
    %v292 = vld [vmem:[%s284 + $0x1c] sm:$0xf]
    %v293 = vld [vmem:[%s284 + $0x20] sm:$0xf]
    %v294 = vld [vmem:[%s284 + $0x24] sm:$0xf]
    %v295 = vld [vmem:[%s284 + $0x28] sm:$0xf]
    %v296 = vld [vmem:[%s284 + $0x2c] sm:$0xf]
    %v297 = vld [vmem:[%s284 + $0x30] sm:$0xf]
    %v298 = vld [vmem:[%s284 + $0x34] sm:$0xf]
    %v299 = vld [vmem:[%s284 + $0x38] sm:$0xf]
    %v300 = vld [vmem:[%s284 + $0x3c] sm:$0xf]
    %v317 = vunpack.c.l.b16 %v285
    %v318 = vunpack.c.l.b16 %v286
    %v319 = vunpack.c.l.b16 %v287
    %v320 = vunpack.c.l.b16 %v288
    %v321 = vunpack.c.l.b16 %v289
    %v322 = vunpack.c.l.b16 %v290
    %v323 = vunpack.c.l.b16 %v291
    %v324 = vunpack.c.l.b16 %v292
    %v325 = vunpack.c.l.b16 %v293
    %v326 = vunpack.c.l.b16 %v294
    %v327 = vunpack.c.l.b16 %v295
    %v328 = vunpack.c.l.b16 %v296
    %v329 = vunpack.c.l.b16 %v297
    %v330 = vunpack.c.l.b16 %v298
    %v331 = vunpack.c.l.b16 %v299
    %v332 = vunpack.c.l.b16 %v300
    %v333 = vpack.c.b16 %v318, %v317
    %v334 = vpack.c.b16 %v320, %v319
    %v335 = vpack.c.b16 %v322, %v321
    %v336 = vpack.c.b16 %v324, %v323
    %v337 = vpack.c.b16 %v326, %v325
    %v338 = vpack.c.b16 %v328, %v327
    %v339 = vpack.c.b16 %v330, %v329
    %v340 = vpack.c.b16 %v332, %v331
    %349 = vmatprep.subr.bf16.mxu0 0
    %350 = vmatpush1.bf16.msra.mxu0 %v340
    %351 = vmatprep.subr.bf16.mxu0 0
    %352 = vmatpush1.bf16.msra.mxu0 %v339
    %353 = vmatprep.subr.bf16.mxu0 0
    %354 = vmatpush1.bf16.msra.mxu0 %v338
    %355 = vmatprep.subr.bf16.mxu0 0
    %356 = vmatpush1.bf16.msra.mxu0 %v337
    %357 = vmatprep.subr.bf16.mxu0 0
    %358 = vmatpush1.bf16.msra.mxu0 %v336
    %359 = vmatprep.subr.bf16.mxu0 0
    %360 = vmatpush1.bf16.msra.mxu0 %v335
    %361 = vmatprep.subr.bf16.mxu0 0
    %362 = vmatpush1.bf16.msra.mxu0 %v334
    %363 = vmatprep.subr.bf16.mxu0 0
    %364 = vmatpush1.bf16.msra.mxu0 %v333
    %365 = vmatprep.subr.bf16.mxu0 0
    %366 = vmatpush2.bf16.msra.mxu0 0
    %367 = vmatprep.subr.bf16.mxu0 0
    %368 = vmatpush2.bf16.msra.mxu0 0
    %369 = vmatprep.subr.bf16.mxu0 0
    %370 = vmatpush2.bf16.msra.mxu0 0
    %371 = vmatprep.subr.bf16.mxu0 0
    %372 = vmatpush2.bf16.msra.mxu0 0
    %373 = vmatprep.subr.bf16.mxu0 0
    %374 = vmatpush2.bf16.msra.mxu0 0
    %375 = vmatprep.subr.bf16.mxu0 0
    %376 = vmatpush2.bf16.msra.mxu0 0
    %377 = vmatprep.subr.bf16.mxu0 0
    %378 = vmatpush2.bf16.msra.mxu0 0
    %379 = vmatprep.subr.bf16.mxu0 0
    %380 = vmatpush2.bf16.msra.mxu0 0
    %381 = vmatprep.mubr.bf16.mxu0 0
    %382 = vmatmul.mubr.bf16.gmra.mxu0 %v283
    %v383 = vpop.f32.mrf.mxu0
    %v384 = vadd.f32 0.0, %v383
    %v385 = vpop.f32.mrf.mxu0
    %v386 = vpop.f32.mrf.mxu0
    %v387 = vpop.f32.mrf.mxu0
    %388 = vdwg.mxu0
    %v389 = vrot.slane %v384, 4
    %v390 = vadd.f32 %v384, %v389
    %v391 = vrot.slane %v390, 2
    %v392 = vadd.f32 %v390, %v391
    %v393 = vrot.slane %v392, 1
    %v394 = vadd.f32 %v392, %v393
    %v395 = vmul.f32 %v394, %v122
    %v396 = vsub.f32 %v384, %v395
    %v397 = vmul.f32 %v396, %v396
    %v398 = vrot.slane %v397, 4
    %v399 = vadd.f32 %v397, %v398
    %v400 = vrot.slane %v399, 2
    %v401 = vadd.f32 %v399, %v400
    %v402 = vrot.slane %v401, 1
    %v403 = vadd.f32 %v401, %v402
    %v404 = vmul.f32 %v403, %v122
    %v405 = vadd.f32 %v404, 1e-05
    %v406 = vrsqrt.pop %v405
    %v407 = vmul.f32 %v53, %v406
    %v408 = vlaneseq
    %v409 = vshrl.u32 %v408, 7
    %v410 = vsub.s32 2, %v409
    %v411 = vrot.slane %v407, %v410
    %v412 = vmul.f32 %v411, %v396
    %v413 = vlaneseq
    %v414 = vshrl.u32 %v413, 7
    %v415 = vsub.s32 5, %v414
    %v416 = vrot.slane %v53, %v415
    %v417 = vadd.f32 %v412, %v416
    %v418 = vmax.f32 %v417, 0.0
    %v419 = vpack.c.bf16 %v418, %v418
    %s420 = scalar_lea.vmem [#allocation5], 192
    %v421 = vld [vmem:[%s420] sm:$0xf]
    %v422 = vld [vmem:[%s420 + $0x4] sm:$0xf]
    %v423 = vld [vmem:[%s420 + $0x8] sm:$0xf]
    %v424 = vld [vmem:[%s420 + $0xc] sm:$0xf]
    %v425 = vld [vmem:[%s420 + $0x10] sm:$0xf]
    %v426 = vld [vmem:[%s420 + $0x14] sm:$0xf]
    %v427 = vld [vmem:[%s420 + $0x18] sm:$0xf]
    %v428 = vld [vmem:[%s420 + $0x1c] sm:$0xf]
    %v429 = vld [vmem:[%s420 + $0x20] sm:$0xf]
    %v430 = vld [vmem:[%s420 + $0x24] sm:$0xf]
    %v431 = vld [vmem:[%s420 + $0x28] sm:$0xf]
    %v432 = vld [vmem:[%s420 + $0x2c] sm:$0xf]
    %v433 = vld [vmem:[%s420 + $0x30] sm:$0xf]
    %v434 = vld [vmem:[%s420 + $0x34] sm:$0xf]
    %v435 = vld [vmem:[%s420 + $0x38] sm:$0xf]
    %v436 = vld [vmem:[%s420 + $0x3c] sm:$0xf]
    %v437 = vlaneseq
    %v438 = vshrl.u32 %v437, 7
    %v439 = vsub.s32 6, %v438
    %v440 = vrot.slane %v53, %v439
    %v457 = vunpack.c.l.b16 %v421
    %v458 = vunpack.c.l.b16 %v422
    %v459 = vunpack.c.l.b16 %v423
    %v460 = vunpack.c.l.b16 %v424
    %v461 = vunpack.c.l.b16 %v425
    %v462 = vunpack.c.l.b16 %v426
    %v463 = vunpack.c.l.b16 %v427
    %v464 = vunpack.c.l.b16 %v428
    %v465 = vunpack.c.l.b16 %v429
    %v466 = vunpack.c.l.b16 %v430
    %v467 = vunpack.c.l.b16 %v431
    %v468 = vunpack.c.l.b16 %v432
    %v469 = vunpack.c.l.b16 %v433
    %v470 = vunpack.c.l.b16 %v434
    %v471 = vunpack.c.l.b16 %v435
    %v472 = vunpack.c.l.b16 %v436
    %v473 = vpack.c.b16 %v458, %v457
    %v474 = vpack.c.b16 %v460, %v459
    %v475 = vpack.c.b16 %v462, %v461
    %v476 = vpack.c.b16 %v464, %v463
    %v477 = vpack.c.b16 %v466, %v465
    %v478 = vpack.c.b16 %v468, %v467
    %v479 = vpack.c.b16 %v470, %v469
    %v480 = vpack.c.b16 %v472, %v471
    %489 = vmatprep.subr.bf16.mxu0 0
    %490 = vmatpush1.bf16.msra.mxu0 %v480
    %491 = vmatprep.subr.bf16.mxu0 0
    %492 = vmatpush1.bf16.msra.mxu0 %v479
    %493 = vmatprep.subr.bf16.mxu0 0
    %494 = vmatpush1.bf16.msra.mxu0 %v478
    %495 = vmatprep.subr.bf16.mxu0 0
    %496 = vmatpush1.bf16.msra.mxu0 %v477
    %497 = vmatprep.subr.bf16.mxu0 0
    %498 = vmatpush1.bf16.msra.mxu0 %v476
    %499 = vmatprep.subr.bf16.mxu0 0
    %500 = vmatpush1.bf16.msra.mxu0 %v475
    %501 = vmatprep.subr.bf16.mxu0 0
    %502 = vmatpush1.bf16.msra.mxu0 %v474
    %503 = vmatprep.subr.bf16.mxu0 0
    %504 = vmatpush1.bf16.msra.mxu0 %v473
    %505 = vmatprep.subr.bf16.mxu0 0
    %506 = vmatpush2.bf16.msra.mxu0 0
    %507 = vmatprep.subr.bf16.mxu0 0
    %508 = vmatpush2.bf16.msra.mxu0 0
    %509 = vmatprep.subr.bf16.mxu0 0
    %510 = vmatpush2.bf16.msra.mxu0 0
    %511 = vmatprep.subr.bf16.mxu0 0
    %512 = vmatpush2.bf16.msra.mxu0 0
    %513 = vmatprep.subr.bf16.mxu0 0
    %514 = vmatpush2.bf16.msra.mxu0 0
    %515 = vmatprep.subr.bf16.mxu0 0
    %516 = vmatpush2.bf16.msra.mxu0 0
    %517 = vmatprep.subr.bf16.mxu0 0
    %518 = vmatpush2.bf16.msra.mxu0 0
    %519 = vmatprep.subr.bf16.mxu0 0
    %520 = vmatpush2.bf16.msra.mxu0 0
    %521 = vmatprep.mubr.bf16.mxu0 0
    %522 = vmatmul.mubr.bf16.gmra.mxu0 %v419
    %v523 = vpop.f32.mrf.mxu0
    %v524 = vadd.f32 %v440, %v523
    %v525 = vpop.f32.mrf.mxu0
    %v526 = vpop.f32.mrf.mxu0
    %v527 = vpop.f32.mrf.mxu0
    %528 = vdwg.mxu0
    %529 = vst [vmem:[#allocation8] sm:$0xff] %v524
    // Predicated region
    $region26: #{mynet3_forward.1} parent=1 // pred_check
      _
    $region27: #{mynet3_forward.1} parent=1 // pred_check_branch
      %531 = sbr.rel (0) target = $region29
    $region28: #{mynet3_forward.1} parent=1 // pred_region
      %s533 = ssub.s32 128, 128
      %534 = vsyncadd [#allocation4], %s533
      %s536 = sshll.u32 [#allocation8], 4
      %s537 = int_to_ptr.vmem [resolvable:$true] %s536
      %539 = dma.vmem_to_hbm [thread:$0]  %s537, 128, %s3, [#allocation4]
    $region29: #{mynet3_forward.1} parent=1 // pred_fallthru
      _
    // Predicated region
    $region30: #{mynet3_forward.1} parent=1 // pred_check
      _
    $region31: #{mynet3_forward.1} parent=1 // pred_check_branch
      %541 = sbr.rel (0) target = $region33
    $region32: #{mynet3_forward.1} parent=1 // pred_region
      %542 = dma.done [#allocation4], 128
    $region33: #{mynet3_forward.1} parent=1 // pred_fallthru
      _
    %543 = vsyncpa [#allocation3], 1
    %544 = vsyncpa [#allocation6], 1
    %545 = vsyncpa [#allocation4], 1

</llo_original>
